<compile_context>
chip_gen: v6e
topology: v6e:2x2x1
jax: 0.10.0
libtpu: 0.0.40
codegen_flags: <defaults>
</compile_context>

<pallas_src>
import functools

import jax
import jax.numpy as jnp
from jax.experimental import pallas as pl
from jax.experimental.pallas import tpu as pltpu

_FAST_PATH_BYTES = 2 * 1024 * 1024          # below this, skip pallas_call entirely
_MAX_SLAB_BYTES = 4 * 1024 * 1024           # max bytes for a single (1, N, td) slab
_TARGET_TILE_BYTES = 4 * 1024 * 1024        # target input bytes per grid step
_VMEM_LIMIT_CAP = 48 * 1024 * 1024          # stay under v7x's 64 MiB per-TC VMEM


def _add_readout_kernel(x_ref, o_ref, *, start_index: int):
    # x_ref: (TB, N, TD) input slab;  o_ref: (TB, N - start_index, TD).
    # Ref-level slices: the sublane-offset load is strip-mined and fused
    # directly into the VPU broadcast add (no whole-tile retile copy).
    o_ref[...] = x_ref[:, start_index:, :] + x_ref[:, 0:1, :]


def _choose_tiles(B: int, N: int, D: int, itemsize: int):
    """Pick (batch_tile, hidden_tile): big, contiguous, lane-dense, VMEM-safe."""
    # Hidden dim: keep td == D (fully contiguous DMAs, widest unmasked stores)
    # unless a single (1, N, D) slab exceeds _MAX_SLAB_BYTES; only then split,
    # and only to lane-dense multiples of 128.
    td = D
    if D % 128 == 0:
        while (N * td * itemsize > _MAX_SLAB_BYTES
               and td % 256 == 0 and D % (td // 2) == 0):
            td //= 2

    # Batch tile: target ~4 MiB of input per grid step, snapped to a divisor.
    per_batch = N * td * itemsize
    tb = max(1, min(B, _TARGET_TILE_BYTES // per_batch))
    while B % tb != 0:
        tb -= 1

    # Ensure >= 2 grid steps, and an even count when possible, so both v7x
    # TensorCores get balanced work (no-op on single-TC v5e/v6e).
    def n_steps(tb_):
        return (B // tb_) * (D // td)

    while tb > 1 and (n_steps(tb) < 2 or n_steps(tb) % 2 != 0):
        tb -= 1
        while tb > 1 and B % tb != 0:
            tb -= 1
    return max(tb, 1), td


def add_readout_ref(x: jax.Array, start_index: int = 1) -> jax.Array:
    """Pure-JAX reference matching the PyTorch forward exactly."""
    readout = x[:, 0]
    return x[:, start_index:] + readout[:, None, :]


def add_readout(x: jax.Array, start_index: int = 1, *,
                block_b: int | None = None, block_d: int | None = None,
                force_pallas: bool = False) -> jax.Array:
    """x: (B, N, D) -> (B, N - start_index, D)."""
    B, N, D = x.shape
    out_tokens = N - start_index
    itemsize = jnp.dtype(x.dtype).itemsize

    # Small-problem fast path: launch + pipeline prologue would dominate.
    if (block_b is None and block_d is None and not force_pallas
            and B * N * D * itemsize < _FAST_PATH_BYTES):
        return add_readout_ref(x, start_index)

    tb, td = _choose_tiles(B, N, D, itemsize)
    if block_b is not None:
        tb = block_b
    if block_d is not None:
        td = block_d
    assert B % tb == 0 and D % td == 0, (tb, td, B, D)
    assert td == D or td % 128 == 0, "hidden tile must be lane-dense or full extent"

    grid = (B // tb, D // td)  # batch axis (larger trip count) leads
    kernel = functools.partial(_add_readout_kernel, start_index=start_index)

    # Double-buffered input + output tiles, plus headroom; cap for v7x.
    in_block_bytes = tb * N * td * itemsize
    out_block_bytes = tb * out_tokens * td * itemsize
    vmem_needed = 2 * (in_block_bytes + out_block_bytes) + (2 << 20)
    vmem_limit = min(_VMEM_LIMIT_CAP, max(vmem_needed, 32 * 1024 * 1024))

    cost = pl.CostEstimate(
        flops=B * out_tokens * D,
        transcendentals=0,
        bytes_accessed=(B * N * D + B * out_tokens * D) * itemsize,
    )

    return pl.pallas_call(
        kernel,
        out_shape=jax.ShapeDtypeStruct((B, out_tokens, D), x.dtype),
        grid_spec=pltpu.PrefetchScalarGridSpec(
            num_scalar_prefetch=0,
            grid=grid,
            # Token axes use the full extents (N in, out_tokens out), which
            # satisfies the (8,128) constraint for any N / start_index.
            in_specs=[pl.BlockSpec((tb, N, td), lambda b, d: (b, 0, d))],
            out_specs=pl.BlockSpec((tb, out_tokens, td), lambda b, d: (b, 0, d)),
        ),
        compiler_params=pltpu.CompilerParams(
            dimension_semantics=("parallel", "parallel"),
            vmem_limit_bytes=vmem_limit,
        ),
        cost_estimate=cost,
    )(x)


if __name__ == "__main__":
    key = jax.random.PRNGKey(0)

    # Case 1: tiny DPT-like shape (B=2, 1 cls + 8 tokens, hidden=32).
    # Small enough to take the fast path; still must match the reference.
    x1 = jax.random.normal(key, (2, 9, 32), dtype=jnp.float32)
    out1 = jax.block_until_ready(add_readout(x1, start_index=1))
    ref1 = add_readout_ref(x1, start_index=1)
    assert out1.shape == (2, 8, 32), out1.shape
    assert jnp.allclose(out1, ref1, atol=1e-6, rtol=1e-6), "mismatch (case 1)"

    # Case 2: force the Pallas path on the same tiny shape (td == full D < 128
    # is allowed because it is the full extent).
    out1p = jax.block_until_ready(add_readout(x1, start_index=1, force_pallas=True))
    assert jnp.allclose(out1p, ref1, atol=1e-6, rtol=1e-6), "mismatch (case 2)"

    # Case 3: lane-aligned hidden dim; force batch- and D-tiling (TB=1, TD=128)
    # to verify the tiled index maps and the ref-level sublane-offset slice.
    x2 = jax.random.normal(jax.random.fold_in(key, 1), (2, 17, 256), dtype=jnp.float32)
    out2 = jax.block_until_ready(add_readout(x2, start_index=1, block_b=1, block_d=128))
    ref2 = add_readout_ref(x2, start_index=1)
    assert out2.shape == (2, 16, 256), out2.shape
    assert jnp.allclose(out2, ref2, atol=1e-6, rtol=1e-6), "mismatch (case 3)"

    # Case 4: DPT/ViT-like shape (B=4, 1 cls + 256 tokens, hidden=768) -- goes
    # through the auto-chooser: td == D (contiguous DMAs), tb picked so the
    # grid has an even number of steps (2 here).
    x3 = jax.random.normal(jax.random.fold_in(key, 2), (4, 257, 768), dtype=jnp.float32)
    out3 = jax.block_until_ready(add_readout(x3, start_index=1))
    ref3 = add_readout_ref(x3, start_index=1)
    assert out3.shape == (4, 256, 768), out3.shape
    assert jnp.allclose(out3, ref3, atol=1e-6, rtol=1e-6), "mismatch (case 4)"

    # start_index=0 edge case (no token dropped).
    out4 = jax.block_until_ready(add_readout(x2, start_index=0, force_pallas=True))
    ref4 = add_readout_ref(x2, start_index=0)
    assert jnp.allclose(out4, ref4, atol=1e-6, rtol=1e-6), "mismatch (start_index=0)"

    print("KERNEL_OK")
</pallas_src>

<mosaic_0001>
module attributes {stable_mosaic.version = 11 : i64} {
  func.func @_add_readout_kernel(%arg0: i32, %arg1: i32, %arg2: memref<1x9x32xf32, #tpu.memory_space<vmem>>, %arg3: memref<1x8x32xf32, #tpu.memory_space<vmem>>) attributes {dimension_semantics = [#tpu.dimension_semantics<parallel>, #tpu.dimension_semantics<parallel>], iteration_bounds = array<i64: 2, 1>, scalar_prefetch = 0 : i64, scratch_operands = 0 : i64, tpu.core_type = #tpu.core_type<tc>, window_params = [{transform_indices = @transform_0, window_bounds = array<i64: 1, 9, 32>}, {transform_indices = @transform_1, window_bounds = array<i64: 1, 8, 32>}]} {
    %c0 = arith.constant 0 : index
    %c1 = arith.constant 1 : index
    %c0_0 = arith.constant 0 : index
    %0 = vector.load %arg2[%c0, %c1, %c0_0] : memref<1x9x32xf32, #tpu.memory_space<vmem>>, vector<1x8x32xf32>
    %c0_1 = arith.constant 0 : index
    %c0_2 = arith.constant 0 : index
    %c0_3 = arith.constant 0 : index
    %1 = vector.load %arg2[%c0_1, %c0_2, %c0_3] : memref<1x9x32xf32, #tpu.memory_space<vmem>>, vector<1x1x32xf32>
    %2 = vector.broadcast %1 : vector<1x1x32xf32> to vector<1x8x32xf32>
    %3 = arith.addf %0, %2 : vector<1x8x32xf32>
    %c0_4 = arith.constant 0 : index
    %c0_5 = arith.constant 0 : index
    %c0_6 = arith.constant 0 : index
    %4 = vector.load %arg3[%c0_4, %c0_5, %c0_6] : memref<1x8x32xf32, #tpu.memory_space<vmem>>, vector<1x8x32xf32>
    tpu.vector_store %arg3[%c0_4, %c0_5, %c0_6], %3 {strides = array<i32>} : memref<1x8x32xf32, #tpu.memory_space<vmem>>, vector<1x8x32xf32>,
    return
  }
  func.func @transform_0(%arg0: i32, %arg1: i32) -> (i32, i32, i32) {
    %c0_i32 = arith.constant 0 : i32
    %c0_i32_0 = arith.constant 0 : i32
    return %arg0, %c0_i32, %arg1 : i32, i32, i32
  }
  func.func @transform_1(%arg0: i32, %arg1: i32) -> (i32, i32, i32) {
    %c0_i32 = arith.constant 0 : i32
    %c0_i32_0 = arith.constant 0 : i32
    return %arg0, %c0_i32, %arg1 : i32, i32, i32
  }
}

</mosaic_0001>

<llo_original>
// kernel: tpu_custom_call.1
$region0: #{tpu_custom_call.1}
  #allocation0 [shape = 'u32[]', space=smem, size = 0x4, offset = 0x4, fixed_abs, tag = 'smem constant byte address 0x4 - core index']
  #allocation1 [shape = 'u32[144,128]{1,0:T(1,128)}', space=vmem, size = 0x12000, scoped, tag = 'internal scratch']
  %s0 = inlined_call_operand.vmem [shape: f32[2,9,32], index: 0, kind: input, shape index: {}]
  %s1 = inlined_call_operand.hbm [shape: f32[2,8,32], index: 1, kind: output, shape index: {}]
  %s2 = sld [smem:[#allocation0]]
  $region37: #{tpu_custom_call.1} parent=0
    _
  %s4 = ssub.s32 1, %s2
  %s5 = scalar_select 0, %s4, %s2
  $region1: #{tpu_custom_call.1} parent=0
    #allocation2 [shape = 'u8[8192]{0}', space=vmem, size = 0x2000, scoped, tag = 'output window, operand 0']
    #allocation3 [shape = 's32[2]{0}', space=sflag, size = 0x8, scoped, tag = 'scoped memory for tpu_custom_call.1']
    %6 = vsyncpa [#allocation3], 0
    %s7 = scalar_lea.sflag [#allocation3], 1
    %8 = vsyncpa %s7, 0
    loop: start=0, step=1, limit=4
    $region2: #{tpu_custom_call.1} parent=1 // loop_pre_header
      _
    $region3: #{tpu_custom_call.1} parent=1 // loop_header
      %s10 = sphi 0, %s14
      %p11 = scmp.ge.s32.totalorder %s10, 4
      %s17 = sphi 0, %s29
      %s18 = sphi 0, %s25
      %s19 = sphi 0, %s17
      %s20 = sphi 0, %s18
      %s21 = sphi 0, %s19
      %s22 = sphi 0, %s20
      %s34 = sphi 0, %s36
      %s37 = sphi 0, %s34
      %s38 = sphi 0, %s37
      %s54 = sphi 0, %s38
      %s62 = sphi 0, %s64
      %s65 = sphi 0, %s62
      %s66 = sphi 0, %s65
      %s82 = sphi 0, %s66
    $region4: #{tpu_custom_call.1} parent=1 // loop_header_branch
      %13 = sbr.rel (%p11) target = $region8
    $region5: #{tpu_custom_call.1} parent=1 // loop_body
      %s15 = ssub.s32 %s10, 1
      %s16 = ssub.s32 %s10, 2
      %s23 = sadd.s32 1, %s18
      %p24 = scmp.ge.s32.totalorder %s23, 1
      %s25 = scalar_select %p24, 0, %s23
      %s26 = sadd.s32 1, %s17
      %s27 = scalar_select %p24, %s26, %s17
      %p28 = scmp.ge.s32.totalorder %s27, 2
      %s29 = scalar_select %p28, 0, %s27
      %s30 = ssub.s32 %s17, %s29
      %s31 = ssub.s32 %s18, %s25
      %s32 = sor.u32 %s30, %s31
      %p33 = scmp.eq.s32.totalorder %s32, 0
      %s35 = sadd.s32 %s34, 1
      %s36 = scalar_select %p33, %s34, %s35
      %p39 = pneg %p33
      %p40 = scmp.eq.s32.totalorder %s10, 1
      %p41 = por %p39, %p40
      %p42 = scmp.ne.s32.totalorder %s34, %s37
      %p43 = scmp.eq.s32.totalorder %s10, 0
      %p44 = por %p42, %p43
      %p45 = scmp.ne.s32.totalorder %s34, %s37
      %p46 = scmp.eq.s32.totalorder %s15, 1
      %p47 = por %p45, %p46
      %p48 = scmp.ne.s32.totalorder %s37, %s38
      %p49 = scmp.eq.s32.totalorder %s15, 0
      %p50 = por %p48, %p49
      %p51 = scmp.ne.s32.totalorder %s37, %s38
      %p52 = scmp.eq.s32.totalorder %s16, 1
      %p53 = por %p51, %p52
      %p55 = scmp.ne.s32.totalorder %s38, %s54
      %p56 = scmp.eq.s32.totalorder %s16, 0
      %p57 = por %p55, %p56
      %s58 = ssub.s32 %s17, %s29
      %s59 = ssub.s32 %s18, %s25
      %s60 = sor.u32 %s58, %s59
      %p61 = scmp.eq.s32.totalorder %s60, 0
      %s63 = sadd.s32 %s62, 1
      %s64 = scalar_select %p61, %s62, %s63
      %p67 = pneg %p61
      %p68 = scmp.eq.s32.totalorder %s10, 1
      %p69 = por %p67, %p68
      %p70 = scmp.ne.s32.totalorder %s62, %s65
      %p71 = scmp.eq.s32.totalorder %s10, 0
      %p72 = por %p70, %p71
      %p73 = scmp.ne.s32.totalorder %s62, %s65
      %p74 = scmp.eq.s32.totalorder %s15, 1
      %p75 = por %p73, %p74
      %p76 = scmp.ne.s32.totalorder %s65, %s66
      %p77 = scmp.eq.s32.totalorder %s15, 0
      %p78 = por %p76, %p77
      %p79 = scmp.ne.s32.totalorder %s65, %s66
      %p80 = scmp.eq.s32.totalorder %s16, 1
      %p81 = por %p79, %p80
      %p83 = scmp.ne.s32.totalorder %s66, %s82
      %p84 = scmp.eq.s32.totalorder %s16, 0
      %p85 = por %p83, %p84
      %p86 = scmp.le.s32.totalorder 1, %s10
      %p87 = scmp.lt.s32.totalorder %s10, 3
      %p88 = pnand %p86, %p87
      %p89 = pneg %p88
      // Predicated region
      $region9: #{tpu_custom_call.1} parent=5 // pred_check
        _
      $region10: #{tpu_custom_call.1} parent=5 // pred_check_branch
        %91 = sbr.rel (%p88) target = $region12
      $region11: #{tpu_custom_call.1} parent=5 // pred_region
        %s92 = ssub.s32 %s10, 1
      $region12: #{tpu_custom_call.1} parent=5 // pred_fallthru
        _
      %p93 = scmp.lt.s32.totalorder %s10, 2
      // Predicated region
      $region13: #{tpu_custom_call.1} parent=5 // pred_check
        %p94 = pneg %p93
      $region14: #{tpu_custom_call.1} parent=5 // pred_check_branch
        %96 = sbr.rel (%p94) target = $region16
      $region15: #{tpu_custom_call.1} parent=5 // pred_region
        // Predicated region
        $region17: #{tpu_custom_call.1} parent=15 // pred_check
          %p97 = pneg %p44
        $region18: #{tpu_custom_call.1} parent=15 // pred_check_branch
          %99 = sbr.rel (%p97) target = $region20
        $region19: #{tpu_custom_call.1} parent=15 // pred_region
          %p100 = scmp.lt.s32.totalorder %s17, 1
          %s101 = scalar_select %p100, %s17, 1
          %p102 = scmp.lt.s32.totalorder %s18, 0
          %s103 = scalar_select %p102, %s18, 0
          %s104 = smul.addr %s101, 2
          %s105 = sadd.s32 %s103, %s104
          %s106 = smul.addr %s105, 8
          %s107 = scalar_lea.vmem %s0, %s106
        $region20: #{tpu_custom_call.1} parent=15 // pred_fallthru
          _
      $region16: #{tpu_custom_call.1} parent=5 // pred_fallthru
        _
      %p108 = scmp.le.s32.totalorder 1, %s10
      %p109 = scmp.lt.s32.totalorder %s10, 3
      %p110 = pnand %p108, %p109
      %p111 = pneg %p110
      // Predicated region
      $region21: #{tpu_custom_call.1} parent=5 // pred_check
        _
      $region22: #{tpu_custom_call.1} parent=5 // pred_check_branch
        %113 = sbr.rel (%p110) target = $region24
      $region23: #{tpu_custom_call.1} parent=5 // pred_region
        %s114 = ssub.s32 %s10, 1
        %p115 = scmp.lt.s32.totalorder %s19, 1
        %s116 = scalar_select %p115, %s19, 1
        %p117 = scmp.lt.s32.totalorder %s20, 0
        %s118 = scalar_select %p117, %s20, 0
        %s119 = smul.addr %s116, 2
        %s120 = sadd.s32 %s118, %s119
        %s121 = smul.addr %s120, 8
        %s122 = scalar_lea.vmem %s0, %s121
        %p123 = pneg %p50
        %p124 = pneg %p47
        %p125 = pneg %p78
        %p126 = pneg %p75
        %s127 = sand.u32 %s65, 1
        %s128 = scalar_lea.sflag [#allocation3], %s127
        %s129 = sand.u32 %s65, 1
        %s130 = smul.addr %s129, 8
        %s131 = scalar_lea.vmem [#allocation2], %s130
        %p132 = scmp.lt.s32.totalorder %s19, 1
        %s133 = scalar_select %p132, %s19, 1
        %p134 = scmp.lt.s32.totalorder %s20, 0
        %s135 = scalar_select %p134, %s20, 0
        %s136 = smul.addr %s133, 2
        %s137 = sadd.s32 %s135, %s136
        %s138 = smul.addr %s137, 8
        %s139 = scalar_lea.vmem %s0, %s138
        %v140 = vld [vmem:[%s139 + $0x1] sm:$0xff]
        %v141 = vld [vmem:[%s139] sm:$0x1]
        %v142 = vlaneseq
        %v143 = vshrl.u32 %v142, 7
        %v144 = vsub.s32 0, %v143
        %v145 = vrot.slane %v141, %v144
        %v146 = vadd.f32 %v140, %v145
        %vm147 = vcmask 261120
        %148 = vst.msk [vmem:[%s131] sm:$0xff] %vm147, %v146
        %s149 = sand.u32 %s65, 1
        %s150 = scalar_lea.sflag [#allocation3], %s149
        %s151 = sand.u32 %s65, 1
        %s152 = smul.addr %s151, 8
        %s153 = scalar_lea.vmem [#allocation2], %s152
        // Predicated region
        $region25: #{tpu_custom_call.1} parent=23 // pred_check
          %p154 = pneg %p75
        $region26: #{tpu_custom_call.1} parent=23 // pred_check_branch
          %156 = sbr.rel (%p154) target = $region28
        $region27: #{tpu_custom_call.1} parent=23 // pred_region
          %s158 = ssub.s32 128, 128
          %159 = vsyncadd %s150, %s158
          %s160 = sadd.s32 %s20, %s19
          %s161 = smul.addr %s160, 128
          %s162 = scalar_lea.hbm %s1, %s161
          %s164 = sshll.u32 %s153, 4
          %s165 = int_to_ptr.vmem [resolvable:$true] %s164
          %167 = dma.vmem_to_hbm [thread:$0]  %s165, 128, %s162, %s150
        $region28: #{tpu_custom_call.1} parent=23 // pred_fallthru
          _
      $region24: #{tpu_custom_call.1} parent=5 // pred_fallthru
        _
      %p168 = scmp.le.s32.totalorder 2, %s10
      // Predicated region
      $region29: #{tpu_custom_call.1} parent=5 // pred_check
        %p169 = pneg %p168
      $region30: #{tpu_custom_call.1} parent=5 // pred_check_branch
        %171 = sbr.rel (%p169) target = $region32
      $region31: #{tpu_custom_call.1} parent=5 // pred_region
        %s172 = ssub.s32 %s10, 2
        // Predicated region
        $region33: #{tpu_custom_call.1} parent=31 // pred_check
          %p173 = pneg %p81
        $region34: #{tpu_custom_call.1} parent=31 // pred_check_branch
          %175 = sbr.rel (%p173) target = $region36
        $region35: #{tpu_custom_call.1} parent=31 // pred_region
          %s176 = sand.u32 %s66, 1
          %s177 = scalar_lea.sflag [#allocation3], %s176
          %s178 = sand.u32 %s66, 1
          %s179 = smul.addr %s178, 8
          %s180 = scalar_lea.vmem [#allocation2], %s179
          %181 = dma.done %s177, 128
        $region36: #{tpu_custom_call.1} parent=31 // pred_fallthru
          _
      $region32: #{tpu_custom_call.1} parent=5 // pred_fallthru
        _
    $region6: #{tpu_custom_call.1} parent=1 // loop_footer
      %s14 = sadd.s32 1, %s10
    $region7: #{tpu_custom_call.1} parent=1 // loop_footer_branch
      %9 = sbr.rel target = $region3
    $region8: #{tpu_custom_call.1} parent=1 // loop_exit
      _
    %182 = vsyncpa [#allocation3], 1
    %s183 = scalar_lea.sflag [#allocation3], 1
    %184 = vsyncpa %s183, 1

</llo_original>
